<compile_context>
chip_gen: v6e
topology: v6e:2x2x1
jax: 0.10.0
libtpu: 0.0.40
codegen_flags: <defaults>
</compile_context>

<pallas_src>
import functools
import math

import jax
import jax.numpy as jnp
from jax.experimental import pallas as pl
from jax.experimental.pallas import tpu as pltpu


def _softmax_bce_kernel(x_ref, t_ref, o_ref, acc_ref, *, b_total, nb, hw, tile):
    """One (nb, C, tile) block of the flattened (B, C, HW) tensors.

    x_ref / t_ref : (nb, C, tile) VMEM input blocks.
    o_ref         : (1, 1) f32 VMEM block = partial loss sum of this batch block.
    acc_ref       : (nb, C, tile) f32 VMEM scratch, resident across the
                    lane-tile ('arbitrary') axis; plain VPU add each step,
                    one scalar reduction only on the last step.
    """
    bi = pl.program_id(0)
    ti = pl.program_id(1)

    @pl.when(ti == 0)
    def _init():
        acc_ref[...] = jnp.zeros_like(acc_ref)

    x = x_ref[...].astype(jnp.float32)          # (nb, C, tile)
    t = t_ref[...].astype(jnp.float32)

    # Numerically stable softmax over the channel (sublane) axis.
    m = jnp.max(x, axis=1, keepdims=True)       # (nb, 1, tile)
    xs = x - m
    e = jnp.exp(xs)                             # 1 transcendental / element
    s = jnp.sum(e, axis=1, keepdims=True)       # (nb, 1, tile)
    log_s = jnp.log(s)                          # per-column only
    inv_s = 1.0 / s                             # exact; per-column only
    p = e * inv_s

    # PyTorch BCELoss clamps each log term at -100.
    log_p = jnp.maximum(xs - log_s, -100.0)     # log-softmax identity
    log_1mp = jnp.maximum(jnp.log(1.0 - p), -100.0)
    # == -(t*log_p + (1-t)*log_1mp) with one fewer mul and no (1-t) temp.
    loss = -(log_1mp + t * (log_p - log_1mp))

    # Mask padded lanes of a non-divisible HW tail (static: compiled only when
    # needed); padded columns can never pollute valid ones (softmax is per-lane).
    if hw % tile != 0:
        lane = jax.lax.broadcasted_iota(jnp.int32, loss.shape, 2) + ti * tile
        loss = jnp.where(lane < hw, loss, 0.0)
    # Mask padded batch rows of a non-divisible batch tail.
    if b_total % nb != 0:
        row = jax.lax.broadcasted_iota(jnp.int32, loss.shape, 0) + bi * nb
        loss = jnp.where(row < b_total, loss, 0.0)

    acc_ref[...] += loss                        # plain VPU add, no XLU, no SMEM RMW

    @pl.when(ti == pl.num_programs(1) - 1)
    def _finalize():
        o_ref[...] = jnp.sum(acc_ref[...]).reshape(1, 1)


@functools.partial(jax.jit, static_argnames=("tile_hw", "batch_block"))
def softmax_bce_loss(output, target, *, tile_hw=8192, batch_block=8):
    """Scalar f32 loss == torch.nn.BCELoss()(softmax(output, dim=1), target)."""
    assert output.shape == target.shape
    assert output.ndim >= 2
    B, C = output.shape[0], output.shape[1]
    HW = math.prod(output.shape[2:]) if output.ndim > 2 else 1

    # Contiguous reshape only (no transpose => no extra HBM pass).
    x3d = output.reshape(B, C, HW)
    t3d = target.reshape(B, C, HW)

    # Lane tile: full HW if it fits, otherwise a 128-aligned tile.
    if HW <= tile_hw:
        tile = HW
    else:
        tile = max(128, (tile_hw // 128) * 128)
    nb = max(1, min(B, batch_block))

    # Keep double-buffered inputs + f32 accumulator comfortably under the
    # 32 MiB scoped-VMEM limit (v7x has only 64 MiB physical VMEM per core).
    c_pad = ((C + 7) // 8) * 8
    in_item = jnp.dtype(output.dtype).itemsize
    budget = 24 * 1024 * 1024

    def per_lane(nb_):
        # 2 inputs x 2 pipeline buffers (input dtype) + 1 f32 accumulator.
        return nb_ * c_pad * (2 * 2 * in_item + 4)

    while nb > 1 and tile * per_lane(nb) > budget:
        nb = (nb + 1) // 2
    if tile * per_lane(nb) > budget:
        tile = max(128, (budget // per_lane(nb)) // 128 * 128)

    nt = pl.cdiv(HW, tile)
    nbb = pl.cdiv(B, nb)
    total = B * C * HW
    inv_total = 1.0 / total

    kernel = functools.partial(
        _softmax_bce_kernel, b_total=B, nb=nb, hw=HW, tile=tile
    )

    cost = pl.CostEstimate(
        flops=12 * total,
        transcendentals=2 * total + 2 * B * HW,
        bytes_accessed=2 * total * in_item + 4 * nbb,
    )

    partials = pl.pallas_call(
        kernel,
        out_shape=jax.ShapeDtypeStruct((nbb, 1, 1), jnp.float32),
        grid_spec=pltpu.PrefetchScalarGridSpec(
            num_scalar_prefetch=0,
            grid=(nbb, nt),
            in_specs=[
                pl.BlockSpec((nb, C, tile), lambda b, t: (b, 0, t)),
                pl.BlockSpec((nb, C, tile), lambda b, t: (b, 0, t)),
            ],
            out_specs=pl.BlockSpec((None, 1, 1), lambda b, t: (b, 0, 0)),
            scratch_shapes=[pltpu.VMEM((nb, C, tile), jnp.float32)],
        ),
        compiler_params=pltpu.CompilerParams(
            # Batch-block axis writes independent partials -> megacore-parallel
            # on v7x; lane-tile axis is the running reduction -> "arbitrary".
            dimension_semantics=("parallel", "arbitrary"),
            vmem_limit_bytes=32 * 1024 * 1024,
        ),
        cost_estimate=cost,
    )(x3d, t3d)

    # Final tiny reduction + mean scaling in the wrapper (also better f32
    # accuracy than one long serial scalar chain).
    return jnp.sum(partials) * jnp.float32(inv_total)


def _reference(output, target):
    # Pure-JAX reference mirroring torch: softmax(dim=1) -> BCELoss(mean),
    # with PyTorch's -100 clamp on the log terms.
    p = jax.nn.softmax(output.astype(jnp.float32), axis=1)
    t = target.astype(jnp.float32)
    log_p = jnp.maximum(jnp.log(p), -100.0)
    log_1mp = jnp.maximum(jnp.log(1.0 - p), -100.0)
    return jnp.mean(-(t * log_p + (1.0 - t) * log_1mp))


if __name__ == "__main__":
    key = jax.random.PRNGKey(0)
    keys = jax.random.split(key, 6)

    # Case 1: the module's typical NCHW input (single tile, single batch block).
    B, C, H, W = 2, 4, 16, 16
    out1 = jax.random.normal(keys[0], (B, C, H, W), dtype=jnp.float32)
    tgt1 = jax.random.uniform(keys[1], (B, C, H, W), dtype=jnp.float32)  # BCE target in [0,1]
    loss1 = jax.block_until_ready(softmax_bce_loss(out1, tgt1))
    ref1 = jax.block_until_ready(_reference(out1, tgt1))
    assert jnp.allclose(loss1, ref1, rtol=1e-5, atol=1e-5), (loss1, ref1)

    # Case 2: multi-tile lanes with a masked tail (HW=300, tile=128 -> 3 tiles)
    # plus batch blocking with a padded (masked) batch row (B=3, batch_block=2).
    B2, C2, H2, W2 = 3, 4, 15, 20
    out2 = jax.random.normal(keys[2], (B2, C2, H2, W2), dtype=jnp.float32)
    tgt2 = jax.random.uniform(keys[3], (B2, C2, H2, W2), dtype=jnp.float32)
    loss2 = jax.block_until_ready(
        softmax_bce_loss(out2, tgt2, tile_hw=128, batch_block=2)
    )
    ref2 = jax.block_until_ready(_reference(out2, tgt2))
    assert jnp.allclose(loss2, ref2, rtol=1e-5, atol=1e-5), (loss2, ref2)

    # Case 3: bf16 inputs stream at half the HBM bytes; kernel upcasts to f32.
    out3 = jax.random.normal(keys[4], (B, C, H, W), dtype=jnp.bfloat16)
    tgt3 = jax.random.uniform(keys[5], (B, C, H, W), dtype=jnp.bfloat16)
    loss3 = jax.block_until_ready(softmax_bce_loss(out3, tgt3))
    ref3 = jax.block_until_ready(_reference(out3, tgt3))
    assert jnp.allclose(loss3, ref3, rtol=1e-4, atol=1e-4), (loss3, ref3)

    print("KERNEL_OK")
</pallas_src>

<mosaic_0001>
module attributes {stable_mosaic.version = 11 : i64} {
  func.func @_softmax_bce_kernel(%arg0: i32, %arg1: i32, %arg2: memref<2x4x256xf32, #tpu.memory_space<vmem>>, %arg3: memref<2x4x256xf32, #tpu.memory_space<vmem>>, %arg4: memref<1x1x1xf32, #tpu.memory_space<vmem>>, %arg5: memref<2x4x256xf32, #tpu.memory_space<vmem>>) attributes {dimension_semantics = [#tpu.dimension_semantics<parallel>, #tpu.dimension_semantics<arbitrary>], iteration_bounds = array<i64: 1, 1>, scalar_prefetch = 0 : i64, scratch_operands = 1 : i64, tpu.core_type = #tpu.core_type<tc>, window_params = [{transform_indices = @transform_0, window_bounds = array<i64: 2, 4, 256>}, {transform_indices = @transform_1, window_bounds = array<i64: 2, 4, 256>}, {transform_indices = @transform_2, window_bounds = array<i64: 1, 1, 1>}]} {
    %c0_i32 = arith.constant 0 : i32
    %0 = arith.cmpi eq, %arg1, %c0_i32 : i32
    %1 = arith.extui %0 : i1 to i32
    %c0_i32_0 = arith.constant 0 : i32
    %2 = arith.cmpi ne, %1, %c0_i32_0 : i32
    scf.if %2 {
      %cst_20 = arith.constant 0.000000e+00 : f32
      %37 = vector.broadcast %cst_20 : f32 to vector<2x4x256xf32>
      %c0_21 = arith.constant 0 : index
      %c0_22 = arith.constant 0 : index
      %c0_23 = arith.constant 0 : index
      %38 = vector.load %arg5[%c0_21, %c0_22, %c0_23] : memref<2x4x256xf32, #tpu.memory_space<vmem>>, vector<2x4x256xf32>
      tpu.vector_store %arg5[%c0_21, %c0_22, %c0_23], %37 {strides = array<i32>} : memref<2x4x256xf32, #tpu.memory_space<vmem>>, vector<2x4x256xf32>,
    } else {
    }
    %c0 = arith.constant 0 : index
    %c0_1 = arith.constant 0 : index
    %c0_2 = arith.constant 0 : index
    %3 = vector.load %arg2[%c0, %c0_1, %c0_2] : memref<2x4x256xf32, #tpu.memory_space<vmem>>, vector<2x4x256xf32>
    %c0_3 = arith.constant 0 : index
    %c0_4 = arith.constant 0 : index
    %c0_5 = arith.constant 0 : index
    %4 = vector.load %arg3[%c0_3, %c0_4, %c0_5] : memref<2x4x256xf32, #tpu.memory_space<vmem>>, vector<2x4x256xf32>
    %cst = arith.constant dense<0xFF800000> : vector<2x256xf32>
    %5 = vector.multi_reduction <maximumf>, %3, %cst [1] : vector<2x4x256xf32> to vector<2x256xf32>
    %6 = vector.shape_cast %5 : vector<2x256xf32> to vector<2x1x256xf32>
    %7 = vector.broadcast %6 : vector<2x1x256xf32> to vector<2x4x256xf32>
    %8 = arith.subf %3, %7 : vector<2x4x256xf32>
    %9 = math.exp %8 : vector<2x4x256xf32>
    %cst_6 = arith.constant dense<0.000000e+00> : vector<2x256xf32>
    %10 = vector.multi_reduction <add>, %9, %cst_6 [1] : vector<2x4x256xf32> to vector<2x256xf32>
    %11 = vector.shape_cast %10 : vector<2x256xf32> to vector<2x1x256xf32>
    %12 = math.log %11 : vector<2x1x256xf32>
    %cst_7 = arith.constant 1.000000e+00 : f32
    %13 = vector.broadcast %cst_7 : f32 to vector<2x1x256xf32>
    %14 = arith.divf %13, %11 : vector<2x1x256xf32>
    %15 = vector.broadcast %14 : vector<2x1x256xf32> to vector<2x4x256xf32>
    %16 = arith.mulf %9, %15 : vector<2x4x256xf32>
    %17 = vector.broadcast %12 : vector<2x1x256xf32> to vector<2x4x256xf32>
    %18 = arith.subf %8, %17 : vector<2x4x256xf32>
    %cst_8 = arith.constant -1.000000e+02 : f32
    %19 = vector.broadcast %cst_8 : f32 to vector<2x4x256xf32>
    %20 = arith.maximumf %18, %19 : vector<2x4x256xf32>
    %cst_9 = arith.constant 1.000000e+00 : f32
    %21 = vector.broadcast %cst_9 : f32 to vector<2x4x256xf32>
    %22 = arith.subf %21, %16 : vector<2x4x256xf32>
    %23 = math.log %22 : vector<2x4x256xf32>
    %cst_10 = arith.constant -1.000000e+02 : f32
    %24 = vector.broadcast %cst_10 : f32 to vector<2x4x256xf32>
    %25 = arith.maximumf %23, %24 : vector<2x4x256xf32>
    %26 = arith.subf %20, %25 : vector<2x4x256xf32>
    %27 = arith.mulf %4, %26 : vector<2x4x256xf32>
    %28 = arith.addf %25, %27 : vector<2x4x256xf32>
    %cst_11 = arith.constant 0.000000e+00 : f32
    %29 = vector.broadcast %cst_11 : f32 to vector<2x4x256xf32>
    %30 = arith.subf %29, %28 : vector<2x4x256xf32>
    %c0_12 = arith.constant 0 : index
    %c0_13 = arith.constant 0 : index
    %c0_14 = arith.constant 0 : index
    %31 = vector.load %arg5[%c0_12, %c0_13, %c0_14] : memref<2x4x256xf32, #tpu.memory_space<vmem>>, vector<2x4x256xf32>
    %32 = arith.addf %31, %30 : vector<2x4x256xf32>
    %c0_15 = arith.constant 0 : index
    %c0_16 = arith.constant 0 : index
    %c0_17 = arith.constant 0 : index
    %33 = vector.load %arg5[%c0_15, %c0_16, %c0_17] : memref<2x4x256xf32, #tpu.memory_space<vmem>>, vector<2x4x256xf32>
    tpu.vector_store %arg5[%c0_15, %c0_16, %c0_17], %32 {strides = array<i32>} : memref<2x4x256xf32, #tpu.memory_space<vmem>>, vector<2x4x256xf32>,
    %c0_i32_18 = arith.constant 0 : i32
    %34 = arith.cmpi eq, %arg1, %c0_i32_18 : i32
    %35 = arith.extui %34 : i1 to i32
    %c0_i32_19 = arith.constant 0 : i32
    %36 = arith.cmpi ne, %35, %c0_i32_19 : i32
    scf.if %36 {
      %c0_20 = arith.constant 0 : index
      %c0_21 = arith.constant 0 : index
      %c0_22 = arith.constant 0 : index
      %37 = vector.load %arg5[%c0_20, %c0_21, %c0_22] : memref<2x4x256xf32, #tpu.memory_space<vmem>>, vector<2x4x256xf32>
      %38 = vector.shape_cast %37 : vector<2x4x256xf32> to vector<1x2x4x256xf32>
      %cst_23 = arith.constant dense<0.000000e+00> : vector<1xf32>
      %39 = vector.multi_reduction <add>, %38, %cst_23 [1, 2, 3] : vector<1x2x4x256xf32> to vector<1xf32>
      %40 = vector.shape_cast %39 : vector<1xf32> to vector<1x1x1x1xf32>
      %41 = vector.extract %40[0, 0, 0, 0] : f32 from vector<1x1x1x1xf32>
      %42 = vector.broadcast %41 : f32 to vector<1x1xf32>
      %c0_24 = arith.constant 0 : index
      %c0_25 = arith.constant 0 : index
      %c0_26 = arith.constant 0 : index
      %43 = vector.load %arg4[%c0_24, %c0_25, %c0_26] : memref<1x1x1xf32, #tpu.memory_space<vmem>>, vector<1x1x1xf32>
      %44 = vector.shape_cast %43 : vector<1x1x1xf32> to vector<1x1xf32>
      %45 = vector.shape_cast %42 : vector<1x1xf32> to vector<1x1x1xf32>
      tpu.vector_store %arg4[%c0_24, %c0_25, %c0_26], %45 {strides = array<i32>} : memref<1x1x1xf32, #tpu.memory_space<vmem>>, vector<1x1x1xf32>,
    } else {
    }
    return
  }
  func.func @transform_0(%arg0: i32, %arg1: i32) -> (i32, i32, i32) {
    %c0_i32 = arith.constant 0 : i32
    %c0_i32_0 = arith.constant 0 : i32
    return %arg0, %c0_i32, %arg1 : i32, i32, i32
  }
  func.func @transform_1(%arg0: i32, %arg1: i32) -> (i32, i32, i32) {
    %c0_i32 = arith.constant 0 : i32
    %c0_i32_0 = arith.constant 0 : i32
    return %arg0, %c0_i32, %arg1 : i32, i32, i32
  }
  func.func @transform_2(%arg0: i32, %arg1: i32) -> (i32, i32, i32) {
    %c0_i32 = arith.constant 0 : i32
    %c0_i32_0 = arith.constant 0 : i32
    %c0_i32_1 = arith.constant 0 : i32
    return %arg0, %c0_i32, %c0_i32_0 : i32, i32, i32
  }
}

</mosaic_0001>

<llo_original>
// kernel: softmax_bce_loss.1
$region0: #{softmax_bce_loss.1}
  #allocation0 [shape = 'u32[]', space=smem, size = 0x4, offset = 0x4, fixed_abs, tag = 'smem constant byte address 0x4 - core index']
  #allocation1 [shape = 'u32[144,128]{1,0:T(1,128)}', space=vmem, size = 0x12000, scoped, tag = 'internal scratch']
  #allocation2 [shape = 'f32[2,4,256]{2,1,0:T(4,128)}', space=vmem, size = 0x2000, scoped, tag = 'scratch operand']
  %s0 = inlined_call_operand.vmem [shape: f32[2,4,256], index: 0, kind: input, shape index: {}]
  %s1 = inlined_call_operand.vmem [shape: f32[2,4,256], index: 1, kind: input, shape index: {}]
  %s2 = inlined_call_operand.hbm [shape: f32[1,1,1], index: 2, kind: output, shape index: {}]
  %s3 = sld [smem:[#allocation0]]
  $region26: #{softmax_bce_loss.1} parent=0
    _
  %s5 = ssub.s32 1, %s3
  %s6 = scalar_select 0, %s5, %s3
  $region1: #{softmax_bce_loss.1} parent=0
    #allocation3 [shape = 'u8[512]{0}', space=vmem, size = 0x400, scoped, tag = 'output window, operand 0, single buffered']
    #allocation4 [shape = 's32[1]{0}', space=sflag, size = 0x4, scoped, tag = 'scoped memory for softmax_bce_loss.1']
    %7 = vsyncpa [#allocation4], 0
    // Predicated region
    $region2: #{softmax_bce_loss.1} parent=1 // pred_check
      _
    $region3: #{softmax_bce_loss.1} parent=1 // pred_check_branch
      %9 = sbr.rel (0) target = $region5
    $region4: #{softmax_bce_loss.1} parent=1 // pred_region
      _
    $region5: #{softmax_bce_loss.1} parent=1 // pred_fallthru
      _
    // Predicated region
    $region6: #{softmax_bce_loss.1} parent=1 // pred_check
      _
    $region7: #{softmax_bce_loss.1} parent=1 // pred_check_branch
      %11 = sbr.rel (0) target = $region9
    $region8: #{softmax_bce_loss.1} parent=1 // pred_region
      _
    $region9: #{softmax_bce_loss.1} parent=1 // pred_fallthru
      _
    %p12 = scmp.eq.s32.totalorder 0, 0
    // Predicated region
    $region10: #{softmax_bce_loss.1} parent=1 // pred_check
      %p13 = pneg %p12
    $region11: #{softmax_bce_loss.1} parent=1 // pred_check_branch
      %15 = sbr.rel (%p13) target = $region13
    $region12: #{softmax_bce_loss.1} parent=1 // pred_region
      %16 = vst [vmem:[#allocation2] sm:$0xff] 0.0
      %17 = vst [vmem:[#allocation2 + $0x8] sm:$0xff] 0.0
    $region13: #{softmax_bce_loss.1} parent=1 // pred_fallthru
      _
    %v18 = vld [vmem:[%s0] sm:$0xff]
    %v19 = vld [vmem:[%s0 + $0x8] sm:$0xff]
    %v20 = vld [vmem:[%s1] sm:$0xff]
    %v21 = vld [vmem:[%s1 + $0x8] sm:$0xff]
    %v24 = vcombine.high %v18, %v18
    %v25 = vcombine.high %v19, %v19
    %vm28 = vcmask 1043456
    %v29 = vsel %vm28, %v18, -inf
    %v30 = vrot.slane %v29, 4
    %v31 = vmax.f32 %v29, %v30
    %v32 = vrot.slane %v31, 2
    %v33 = vmax.f32 %v31, %v32
    %v34 = vrot.slane %v33, 1
    %v35 = vmax.f32 %v33, %v34
    %v36 = vsel %vm28, %v24, -inf
    %v37 = vrot.slane %v36, 4
    %v38 = vmax.f32 %v36, %v37
    %v39 = vrot.slane %v38, 2
    %v40 = vmax.f32 %v38, %v39
    %v41 = vrot.slane %v40, 1
    %v42 = vmax.f32 %v40, %v41
    %v43 = vsel %vm28, %v19, -inf
    %v44 = vrot.slane %v43, 4
    %v45 = vmax.f32 %v43, %v44
    %v46 = vrot.slane %v45, 2
    %v47 = vmax.f32 %v45, %v46
    %v48 = vrot.slane %v47, 1
    %v49 = vmax.f32 %v47, %v48
    %v50 = vsel %vm28, %v25, -inf
    %v51 = vrot.slane %v50, 4
    %v52 = vmax.f32 %v50, %v51
    %v53 = vrot.slane %v52, 2
    %v54 = vmax.f32 %v52, %v53
    %v55 = vrot.slane %v54, 1
    %v56 = vmax.f32 %v54, %v55
    %v61 = vcombine.low %v35, %v42
    %v62 = vcombine.low %v49, %v56
    %v65 = vsub.f32 %v18, %v61
    %v66 = vsub.f32 %v19, %v62
    %v67 = vmul.f32 %v65, 1.442695
    %v68 = vpow.pop %v67
    %v69 = vmul.f32 %v66, 1.442695
    %v70 = vpow.pop %v69
    %v73 = vcombine.high %v68, %v68
    %v74 = vcombine.high %v70, %v70
    %v77 = vsel %vm28, %v68, 0.0
    %v78 = vrot.slane %v77, 4
    %v79 = vadd.f32 %v77, %v78
    %v80 = vrot.slane %v79, 2
    %v81 = vadd.f32 %v79, %v80
    %v82 = vrot.slane %v81, 1
    %v83 = vadd.f32 %v81, %v82
    %v84 = vsel %vm28, %v73, 0.0
    %v85 = vrot.slane %v84, 4
    %v86 = vadd.f32 %v84, %v85
    %v87 = vrot.slane %v86, 2
    %v88 = vadd.f32 %v86, %v87
    %v89 = vrot.slane %v88, 1
    %v90 = vadd.f32 %v88, %v89
    %v91 = vsel %vm28, %v70, 0.0
    %v92 = vrot.slane %v91, 4
    %v93 = vadd.f32 %v91, %v92
    %v94 = vrot.slane %v93, 2
    %v95 = vadd.f32 %v93, %v94
    %v96 = vrot.slane %v95, 1
    %v97 = vadd.f32 %v95, %v96
    %v98 = vsel %vm28, %v74, 0.0
    %v99 = vrot.slane %v98, 4
    %v100 = vadd.f32 %v98, %v99
    %v101 = vrot.slane %v100, 2
    %v102 = vadd.f32 %v100, %v101
    %v103 = vrot.slane %v102, 1
    %v104 = vadd.f32 %v102, %v103
    %v105 = vlog2.pop %v83
    %v106 = vmul.f32 %v105, 0.6931472
    %v107 = vlog2.pop %v90
    %v108 = vmul.f32 %v107, 0.6931472
    %v109 = vlog2.pop %v97
    %v110 = vmul.f32 %v109, 0.6931472
    %v111 = vlog2.pop %v104
    %v112 = vmul.f32 %v111, 0.6931472
    %v113 = vrcp.pop %v83
    %v114 = vmul.f32 1.0, %v113
    %v115 = vrcp.pop %v90
    %v116 = vmul.f32 1.0, %v115
    %v117 = vrcp.pop %v97
    %v118 = vmul.f32 1.0, %v117
    %v119 = vrcp.pop %v104
    %v120 = vmul.f32 1.0, %v119
    %v125 = vcombine.low %v114, %v116
    %v126 = vcombine.low %v118, %v120
    %v129 = vmul.f32 %v68, %v125
    %v130 = vmul.f32 %v70, %v126
    %v135 = vcombine.low %v106, %v108
    %v136 = vcombine.low %v110, %v112
    %v139 = vsub.f32 %v65, %v135
    %v140 = vsub.f32 %v66, %v136
    %v141 = vmax.f32 %v139, -100.0
    %v142 = vmax.f32 %v140, -100.0
    %v143 = vsub.f32 1.0, %v129
    %v144 = vsub.f32 1.0, %v130
    %v145 = vlog2.pop %v143
    %v146 = vmul.f32 %v145, 0.6931472
    %v147 = vlog2.pop %v144
    %v148 = vmul.f32 %v147, 0.6931472
    %v149 = vmax.f32 %v146, -100.0
    %v150 = vmax.f32 %v148, -100.0
    %v151 = vsub.f32 %v141, %v149
    %v152 = vsub.f32 %v142, %v150
    %v153 = vmul.f32 %v20, %v151
    %v154 = vmul.f32 %v21, %v152
    %v155 = vadd.f32 %v149, %v153
    %v156 = vadd.f32 %v150, %v154
    %v157 = vsub.f32 0.0, %v155
    %v158 = vsub.f32 0.0, %v156
    %v159 = vld [vmem:[#allocation2] sm:$0xff]
    %v160 = vld [vmem:[#allocation2 + $0x8] sm:$0xff]
    %v161 = vadd.f32 %v159, %v157
    %v162 = vadd.f32 %v160, %v158
    %163 = vst [vmem:[#allocation2] sm:$0xff] %v161
    %164 = vst [vmem:[#allocation2 + $0x8] sm:$0xff] %v162
    // Predicated region
    $region14: #{softmax_bce_loss.1} parent=1 // pred_check
      %p165 = pneg %p12
    $region15: #{softmax_bce_loss.1} parent=1 // pred_check_branch
      %167 = sbr.rel (%p165) target = $region17
    $region16: #{softmax_bce_loss.1} parent=1 // pred_region
      %v168 = vld [vmem:[#allocation2] sm:$0xff]
      %v169 = vld [vmem:[#allocation2 + $0x8] sm:$0xff]
      %v172 = vcombine.high %v168, %v168
      %v173 = vcombine.high %v169, %v169
      %v176 = vsel %vm28, %v168, 0.0
      %v177 = vsel %vm28, %v172, 0.0
      %v178 = vadd.f32 %v176, %v177
      %v179 = vsel %vm28, %v169, 0.0
      %v180 = vadd.f32 %v178, %v179
      %v181 = vsel %vm28, %v173, 0.0
      %v182 = vadd.f32 %v180, %v181
      %183 = vadd.xlane.f32.xlu0 %v182
      %v184 = vpop.xlane.xlu0 %183
      %v185 = vrot.slane %v184, 4
      %v186 = vadd.f32 %v184, %v185
      %v187 = vrot.slane %v186, 2
      %v188 = vadd.f32 %v186, %v187
      %v189 = vrot.slane %v188, 1
      %v190 = vadd.f32 %v188, %v189
      %s191 = vtos %v190
      %v192 = vstv %s191
      %vm193 = vcmask 0
      %194 = vst.msk [vmem:[#allocation3] sm:$0x1] %vm193, %v192
    $region17: #{softmax_bce_loss.1} parent=1 // pred_fallthru
      _
    // Predicated region
    $region18: #{softmax_bce_loss.1} parent=1 // pred_check
      _
    $region19: #{softmax_bce_loss.1} parent=1 // pred_check_branch
      %196 = sbr.rel (0) target = $region21
    $region20: #{softmax_bce_loss.1} parent=1 // pred_region
      %s198 = ssub.s32 16, 16
      %199 = vsyncadd [#allocation4], %s198
      %s201 = sshll.u32 [#allocation3], 4
      %s202 = int_to_ptr.vmem [resolvable:$true] %s201
      %204 = dma.vmem_to_hbm [thread:$0]  %s202, 16, %s2, [#allocation4]
    $region21: #{softmax_bce_loss.1} parent=1 // pred_fallthru
      _
    // Predicated region
    $region22: #{softmax_bce_loss.1} parent=1 // pred_check
      _
    $region23: #{softmax_bce_loss.1} parent=1 // pred_check_branch
      %206 = sbr.rel (0) target = $region25
    $region24: #{softmax_bce_loss.1} parent=1 // pred_region
      %207 = dma.done [#allocation4], 16
    $region25: #{softmax_bce_loss.1} parent=1 // pred_fallthru
      _
    %208 = vsyncpa [#allocation4], 1

</llo_original>
